<compile_context>
chip_gen: v5e
topology: v5e:2x2
jax: 0.10.0
libtpu: 0.0.40
codegen_flags: <defaults>
</compile_context>

<pallas_src>
import functools

import jax
import jax.numpy as jnp
from jax import lax
from jax.experimental import pallas as pl
from jax.experimental.pallas import tpu as pltpu


def _head_kernel(x_ref, dw_ref, db_ref, ow_ref, ob_ref, out_ref, *, mxu_dtype):
    # x_ref:  [TB, H]    CLS-token features tile
    # dw_ref: [H, H]     torch layout (out_features, in_features)
    # db_ref: [1, H]
    # ow_ref: [Lp, H]    torch layout, label dim zero-padded to Lp (lane-dense)
    # ob_ref: [1, Lp]
    # out_ref:[TB, Lp]
    x = x_ref[...]
    dw = dw_ref[...]
    ow = ow_ref[...]
    if mxu_dtype is not None:
        # bf16 MXU operands, f32 accumulation (v6e/v7x fast path).
        x = x.astype(mxu_dtype)
        dw = dw.astype(mxu_dtype)
        ow = ow.astype(mxu_dtype)

    # dense: contract x's feature dim against W's in_features dim (torch layout),
    # accumulating in f32 on the MXU. No transpose needed.
    h = lax.dot_general(x, dw,
                        dimension_numbers=(((1,), (1,)), ((), ())),
                        preferred_element_type=jnp.float32)
    h = jnp.tanh(h + db_ref[...])  # bias + tanh in f32 (v5e has no bf16 VPU/EUP)

    h_in = h.astype(ow.dtype) if mxu_dtype is not None else h
    logits = lax.dot_general(h_in, ow,
                             dimension_numbers=(((1,), (1,)), ((), ())),
                             preferred_element_type=jnp.float32)
    out_ref[...] = (logits + ob_ref[...]).astype(out_ref.dtype)


def roberta_classification_head(features, dense_w, dense_b, out_w, out_b,
                                *, block_b=256, mxu_dtype=None):
    """features: [B, S, H]; dense_w: [H, H] (torch out x in); dense_b: [H];
    out_w: [L, H] (torch layout); out_b: [L].  Returns [B, L] logits."""
    B, S, H = features.shape
    L = out_w.shape[0]

    # CLS-token slice in the wrapper: only [B, H] ever reaches the kernel
    # (avoids DMAing the full [B, S, H] block to read 1/S of it).
    x_cls = features[:, 0, :]

    # Zero-pad the label dim to a multiple of 128 for lane-dense stores and a
    # fully utilized second matmul; the pad rows/cols are zeros (no-op on math).
    Lp = ((L + 127) // 128) * 128
    ow_pad = jnp.zeros((Lp, H), dtype=out_w.dtype).at[:L, :].set(out_w)
    ob_pad = jnp.zeros((1, Lp), dtype=out_b.dtype).at[0, :L].set(out_b)
    db = dense_b.reshape(1, H)

    # Batch tiling: a single full-B block if it fits, else TB-sized tiles
    # (TB a multiple of 8) with zero padding on the batch dim.
    if B <= block_b:
        TB = B
        B_pad = B
    else:
        TB = ((block_b + 7) // 8) * 8
        B_pad = ((B + TB - 1) // TB) * TB
    if B_pad != B:
        x_cls = jnp.pad(x_cls, ((0, B_pad - B), (0, 0)))

    grid = (B_pad // TB,)
    kernel = functools.partial(_head_kernel, mxu_dtype=mxu_dtype)

    out_padded = pl.pallas_call(
        kernel,
        out_shape=jax.ShapeDtypeStruct((B_pad, Lp), features.dtype),
        grid=grid,
        in_specs=[
            pl.BlockSpec((TB, H), lambda i: (i, 0)),   # batch tile of CLS features
            pl.BlockSpec((H, H), lambda i: (0, 0)),    # dense weight (pinned)
            pl.BlockSpec((1, H), lambda i: (0, 0)),    # dense bias (pinned)
            pl.BlockSpec((Lp, H), lambda i: (0, 0)),   # out_proj weight (pinned)
            pl.BlockSpec((1, Lp), lambda i: (0, 0)),   # out_proj bias (pinned)
        ],
        out_specs=pl.BlockSpec((TB, Lp), lambda i: (i, 0)),
        compiler_params=pltpu.CompilerParams(
            dimension_semantics=("parallel",)),
    )(x_cls, dense_w, db, ow_pad, ob_pad)

    return out_padded[:B, :L]


def _reference(features, dense_w, dense_b, out_w, out_b):
    x = features[:, 0, :]
    x = jnp.tanh(x @ dense_w.T + dense_b)
    return x @ out_w.T + out_b


if __name__ == "__main__":
    # Small config consistent with the module: hidden_size=32, num_labels=4.
    B, S, H, L = 2, 8, 32, 4

    key = jax.random.PRNGKey(0)
    k_feat, k_dw, k_db, k_ow, k_ob = jax.random.split(key, 5)

    features = jax.random.normal(k_feat, (B, S, H), dtype=jnp.float32)
    # nn.Linear(hidden, hidden): weight [H, H], bias [H]
    dense_w = jax.random.normal(k_dw, (H, H), dtype=jnp.float32) * 0.05
    dense_b = jax.random.normal(k_db, (H,), dtype=jnp.float32) * 0.05
    # nn.Linear(hidden, num_labels): weight [L, H], bias [L]
    out_w = jax.random.normal(k_ow, (L, H), dtype=jnp.float32) * 0.05
    out_b = jax.random.normal(k_ob, (L,), dtype=jnp.float32) * 0.05

    ref = _reference(features, dense_w, dense_b, out_w, out_b)

    # f32 path (exact vs reference).
    out = roberta_classification_head(features, dense_w, dense_b, out_w, out_b)
    out = jax.block_until_ready(out)
    assert out.shape == (B, L)
    assert jnp.allclose(out, ref, atol=1e-5, rtol=1e-5), "f32 mismatch vs reference"

    # bf16 MXU-operand path (f32 accumulation), as used on v6e/v7x.
    out_bf16 = roberta_classification_head(
        features, dense_w, dense_b, out_w, out_b, mxu_dtype=jnp.bfloat16)
    out_bf16 = jax.block_until_ready(out_bf16)
    assert jnp.allclose(out_bf16, ref, atol=3e-2, rtol=3e-2), "bf16 mismatch vs reference"

    # Multi-tile path (B > block_b): exercises batch padding + grid over B.
    B2 = 10
    feats2 = jax.random.normal(jax.random.PRNGKey(1), (B2, S, H), dtype=jnp.float32)
    out2 = roberta_classification_head(
        feats2, dense_w, dense_b, out_w, out_b, block_b=8)
    out2 = jax.block_until_ready(out2)
    ref2 = _reference(feats2, dense_w, dense_b, out_w, out_b)
    assert out2.shape == (B2, L)
    assert jnp.allclose(out2, ref2, atol=1e-5, rtol=1e-5), "tiled mismatch vs reference"

    print("KERNEL_OK")
</pallas_src>

<mosaic_0001>
module attributes {stable_mosaic.version = 11 : i64} {
  func.func @_head_kernel(%arg0: i32, %arg1: memref<2x32xf32, #tpu.memory_space<vmem>>, %arg2: memref<32x32xf32, #tpu.memory_space<vmem>>, %arg3: memref<1x32xf32, #tpu.memory_space<vmem>>, %arg4: memref<128x32xf32, #tpu.memory_space<vmem>>, %arg5: memref<1x128xf32, #tpu.memory_space<vmem>>, %arg6: memref<2x128xf32, #tpu.memory_space<vmem>>) attributes {dimension_semantics = [#tpu.dimension_semantics<parallel>], iteration_bounds = array<i64: 1>, scalar_prefetch = 0 : i64, scratch_operands = 0 : i64, tpu.core_type = #tpu.core_type<tc>, window_params = [{transform_indices = @transform_0, window_bounds = array<i64: 2, 32>}, {pipeline_mode = #tpu.pipeline_mode<synchronous>, transform_indices = @transform_1, window_bounds = array<i64: 32, 32>}, {pipeline_mode = #tpu.pipeline_mode<synchronous>, transform_indices = @transform_2, window_bounds = array<i64: 1, 32>}, {pipeline_mode = #tpu.pipeline_mode<synchronous>, transform_indices = @transform_3, window_bounds = array<i64: 128, 32>}, {pipeline_mode = #tpu.pipeline_mode<synchronous>, transform_indices = @transform_4, window_bounds = array<i64: 1, 128>}, {transform_indices = @transform_5, window_bounds = array<i64: 2, 128>}]} {
    %c0 = arith.constant 0 : index
    %c0_0 = arith.constant 0 : index
    %0 = vector.load %arg1[%c0, %c0_0] : memref<2x32xf32, #tpu.memory_space<vmem>>, vector<2x32xf32>
    %c0_1 = arith.constant 0 : index
    %c0_2 = arith.constant 0 : index
    %1 = vector.load %arg2[%c0_1, %c0_2] : memref<32x32xf32, #tpu.memory_space<vmem>>, vector<32x32xf32>
    %c0_3 = arith.constant 0 : index
    %c0_4 = arith.constant 0 : index
    %2 = vector.load %arg4[%c0_3, %c0_4] : memref<128x32xf32, #tpu.memory_space<vmem>>, vector<128x32xf32>
    %cst = arith.constant dense<0.000000e+00> : vector<2x32xf32>
    %3 = tpu.matmul %0, %1, %cst {dimension_numbers = #tpu.dot_dimension_numbers<[1], [1], [0], [0], [0, 0, 1, 0], [], []>} : vector<2x32xf32>, vector<32x32xf32>, vector<2x32xf32> -> vector<2x32xf32>
    %c0_5 = arith.constant 0 : index
    %c0_6 = arith.constant 0 : index
    %4 = vector.load %arg3[%c0_5, %c0_6] : memref<1x32xf32, #tpu.memory_space<vmem>>, vector<1x32xf32>
    %5 = vector.broadcast %4 : vector<1x32xf32> to vector<2x32xf32>
    %6 = arith.addf %3, %5 : vector<2x32xf32>
    %7 = math.tanh %6 : vector<2x32xf32>
    %cst_7 = arith.constant dense<0.000000e+00> : vector<2x128xf32>
    %8 = tpu.matmul %7, %2, %cst_7 {dimension_numbers = #tpu.dot_dimension_numbers<[1], [1], [0], [0], [0, 0, 1, 0], [], []>} : vector<2x32xf32>, vector<128x32xf32>, vector<2x128xf32> -> vector<2x128xf32>
    %c0_8 = arith.constant 0 : index
    %c0_9 = arith.constant 0 : index
    %9 = vector.load %arg5[%c0_8, %c0_9] : memref<1x128xf32, #tpu.memory_space<vmem>>, vector<1x128xf32>
    %10 = vector.broadcast %9 : vector<1x128xf32> to vector<2x128xf32>
    %11 = arith.addf %8, %10 : vector<2x128xf32>
    %c0_10 = arith.constant 0 : index
    %c0_11 = arith.constant 0 : index
    %12 = vector.load %arg6[%c0_10, %c0_11] : memref<2x128xf32, #tpu.memory_space<vmem>>, vector<2x128xf32>
    tpu.vector_store %arg6[%c0_10, %c0_11], %11 {strides = array<i32>} : memref<2x128xf32, #tpu.memory_space<vmem>>, vector<2x128xf32>,
    return
  }
  func.func @transform_0(%arg0: i32) -> (i32, i32) {
    %c0_i32 = arith.constant 0 : i32
    %c0_i32_0 = arith.constant 0 : i32
    return %arg0, %c0_i32 : i32, i32
  }
  func.func @transform_1(%arg0: i32) -> (i32, i32) {
    %c0_i32 = arith.constant 0 : i32
    %c0_i32_0 = arith.constant 0 : i32
    %c0_i32_1 = arith.constant 0 : i32
    return %c0_i32, %c0_i32_0 : i32, i32
  }
  func.func @transform_2(%arg0: i32) -> (i32, i32) {
    %c0_i32 = arith.constant 0 : i32
    %c0_i32_0 = arith.constant 0 : i32
    %c0_i32_1 = arith.constant 0 : i32
    return %c0_i32, %c0_i32_0 : i32, i32
  }
  func.func @transform_3(%arg0: i32) -> (i32, i32) {
    %c0_i32 = arith.constant 0 : i32
    %c0_i32_0 = arith.constant 0 : i32
    %c0_i32_1 = arith.constant 0 : i32
    return %c0_i32, %c0_i32_0 : i32, i32
  }
  func.func @transform_4(%arg0: i32) -> (i32, i32) {
    %c0_i32 = arith.constant 0 : i32
    %c0_i32_0 = arith.constant 0 : i32
    %c0_i32_1 = arith.constant 0 : i32
    return %c0_i32, %c0_i32_0 : i32, i32
  }
  func.func @transform_5(%arg0: i32) -> (i32, i32) {
    %c0_i32 = arith.constant 0 : i32
    %c0_i32_0 = arith.constant 0 : i32
    return %arg0, %c0_i32 : i32, i32
  }
}

</mosaic_0001>

<llo_original>
// kernel: tpu_custom_call.1
$region0: #{tpu_custom_call.1}
  #allocation0 [shape = 'u32[]', space=smem, size = 0x4, offset = 0x4, fixed_abs, tag = 'smem constant byte address 0x4 - core index']
  #allocation1 [shape = 'u32[72,128]{1,0:T(1,128)}', space=vmem, size = 0x9000, scoped, tag = 'internal scratch']
  %s0 = inlined_call_operand.vmem [shape: f32[2,32], index: 0, kind: input, shape index: {}]
  %s1 = inlined_call_operand.vmem [shape: f32[32,32], index: 1, kind: input, shape index: {}]
  %s2 = inlined_call_operand.vmem [shape: f32[1,32], index: 2, kind: input, shape index: {}]
  %s3 = inlined_call_operand.vmem [shape: f32[128,32], index: 3, kind: input, shape index: {}]
  %s4 = inlined_call_operand.vmem [shape: f32[1,128], index: 4, kind: input, shape index: {}]
  %s5 = inlined_call_operand.hbm [shape: f32[2,128], index: 5, kind: output, shape index: {}]
  %s6 = sld [smem:[#allocation0]]
  $region30: #{tpu_custom_call.1} parent=0
    _
  %s8 = ssub.s32 1, %s6
  %s9 = scalar_select 0, %s8, %s6
  $region1: #{tpu_custom_call.1} parent=0
    #allocation2 [shape = 'u8[1024]{0}', space=vmem, size = 0x400, scoped, tag = 'output window, operand 0, single buffered']
    #allocation3 [shape = 's32[1]{0}', space=sflag, size = 0x4, scoped, tag = 'scoped memory for tpu_custom_call.1']
    %10 = vsyncpa [#allocation3], 0
    // Predicated region
    $region2: #{tpu_custom_call.1} parent=1 // pred_check
      _
    $region3: #{tpu_custom_call.1} parent=1 // pred_check_branch
      %12 = sbr.rel (0) target = $region5
    $region4: #{tpu_custom_call.1} parent=1 // pred_region
      _
    $region5: #{tpu_custom_call.1} parent=1 // pred_fallthru
      _
    // Predicated region
    $region6: #{tpu_custom_call.1} parent=1 // pred_check
      _
    $region7: #{tpu_custom_call.1} parent=1 // pred_check_branch
      %14 = sbr.rel (0) target = $region9
    $region8: #{tpu_custom_call.1} parent=1 // pred_region
      _
    $region9: #{tpu_custom_call.1} parent=1 // pred_fallthru
      _
    // Predicated region
    $region10: #{tpu_custom_call.1} parent=1 // pred_check
      _
    $region11: #{tpu_custom_call.1} parent=1 // pred_check_branch
      %16 = sbr.rel (0) target = $region13
    $region12: #{tpu_custom_call.1} parent=1 // pred_region
      _
    $region13: #{tpu_custom_call.1} parent=1 // pred_fallthru
      _
    // Predicated region
    $region14: #{tpu_custom_call.1} parent=1 // pred_check
      _
    $region15: #{tpu_custom_call.1} parent=1 // pred_check_branch
      %18 = sbr.rel (0) target = $region17
    $region16: #{tpu_custom_call.1} parent=1 // pred_region
      _
    $region17: #{tpu_custom_call.1} parent=1 // pred_fallthru
      _
    // Predicated region
    $region18: #{tpu_custom_call.1} parent=1 // pred_check
      _
    $region19: #{tpu_custom_call.1} parent=1 // pred_check_branch
      %20 = sbr.rel (0) target = $region21
    $region20: #{tpu_custom_call.1} parent=1 // pred_region
      _
    $region21: #{tpu_custom_call.1} parent=1 // pred_fallthru
      _
    %v21 = vld [vmem:[%s0] sm:$0x3]
    %v22 = vld [vmem:[%s1] sm:$0xff]
    %v23 = vld [vmem:[%s1 + $0x8] sm:$0xff]
    %v24 = vld [vmem:[%s1 + $0x10] sm:$0xff]
    %v25 = vld [vmem:[%s1 + $0x18] sm:$0xff]
    %v26 = vld [vmem:[%s3] sm:$0xff]
    %v27 = vld [vmem:[%s3 + $0x8] sm:$0xff]
    %v28 = vld [vmem:[%s3 + $0x10] sm:$0xff]
    %v29 = vld [vmem:[%s3 + $0x18] sm:$0xff]
    %v30 = vld [vmem:[%s3 + $0x20] sm:$0xff]
    %v31 = vld [vmem:[%s3 + $0x28] sm:$0xff]
    %v32 = vld [vmem:[%s3 + $0x30] sm:$0xff]
    %v33 = vld [vmem:[%s3 + $0x38] sm:$0xff]
    %v34 = vld [vmem:[%s3 + $0x40] sm:$0xff]
    %v35 = vld [vmem:[%s3 + $0x48] sm:$0xff]
    %v36 = vld [vmem:[%s3 + $0x50] sm:$0xff]
    %v37 = vld [vmem:[%s3 + $0x58] sm:$0xff]
    %v38 = vld [vmem:[%s3 + $0x60] sm:$0xff]
    %v39 = vld [vmem:[%s3 + $0x68] sm:$0xff]
    %v40 = vld [vmem:[%s3 + $0x70] sm:$0xff]
    %v41 = vld [vmem:[%s3 + $0x78] sm:$0xff]
    %v42 = vld [vmem:[%s2] sm:$0x1]
    %v44 = vperm.slane %v42, 0
    %vm46 = vcmask 261120
    %v48 = vsel %vm46, %v21, 0
    %v51 = vsel %vm46, %v22, 0
    %v54 = vsel %vm46, %v23, 0
    %v57 = vsel %vm46, %v24, 0
    %v60 = vsel %vm46, %v25, 0
    %62 = vmatpush.xpose.msra.mxu0 0.0
    %63 = vmatpush.xpose.msra.mxu0 0.0
    %64 = vmatpush.xpose.msra.mxu0 0.0
    %65 = vmatpush.xpose.msra.mxu0 0.0
    %66 = vmatpush.xpose.msra.mxu0 0.0
    %67 = vmatpush.xpose.msra.mxu0 0.0
    %68 = vmatpush.xpose.msra.mxu0 0.0
    %69 = vmatpush.xpose.msra.mxu0 0.0
    %70 = vmatpush.xpose.msra.mxu0 0.0
    %71 = vmatpush.xpose.msra.mxu0 0.0
    %72 = vmatpush.xpose.msra.mxu0 0.0
    %73 = vmatpush.xpose.msra.mxu0 0.0
    %74 = vmatpush.xpose.msra.mxu0 %v60
    %75 = vmatpush.xpose.msra.mxu0 %v57
    %76 = vmatpush.xpose.msra.mxu0 %v54
    %77 = vmatpush.xpose.msra.mxu0 %v51
    %78 = vmatmul.f32.gmra.mxu0 %v48
    %v79 = vpop.f32.mrf.mxu0
    %v80 = vadd.f32 %v44, %v79
    %81 = vdwg.mxu0
    %v82 = vtanh.pop %v80
    %v83 = vld [vmem:[%s4] sm:$0x1]
    %v85 = vperm.slane %v83, 0
    %v88 = vsel %vm46, %v82, 0
    %v91 = vsel %vm46, %v26, 0
    %v94 = vsel %vm46, %v27, 0
    %v97 = vsel %vm46, %v28, 0
    %v100 = vsel %vm46, %v29, 0
    %v103 = vsel %vm46, %v30, 0
    %v106 = vsel %vm46, %v31, 0
    %v109 = vsel %vm46, %v32, 0
    %v112 = vsel %vm46, %v33, 0
    %v115 = vsel %vm46, %v34, 0
    %v118 = vsel %vm46, %v35, 0
    %v121 = vsel %vm46, %v36, 0
    %v124 = vsel %vm46, %v37, 0
    %v127 = vsel %vm46, %v38, 0
    %v130 = vsel %vm46, %v39, 0
    %v133 = vsel %vm46, %v40, 0
    %v136 = vsel %vm46, %v41, 0
    %138 = vmatpush.xpose.msra.mxu0 %v136
    %139 = vmatpush.xpose.msra.mxu0 %v133
    %140 = vmatpush.xpose.msra.mxu0 %v130
    %141 = vmatpush.xpose.msra.mxu0 %v127
    %142 = vmatpush.xpose.msra.mxu0 %v124
    %143 = vmatpush.xpose.msra.mxu0 %v121
    %144 = vmatpush.xpose.msra.mxu0 %v118
    %145 = vmatpush.xpose.msra.mxu0 %v115
    %146 = vmatpush.xpose.msra.mxu0 %v112
    %147 = vmatpush.xpose.msra.mxu0 %v109
    %148 = vmatpush.xpose.msra.mxu0 %v106
    %149 = vmatpush.xpose.msra.mxu0 %v103
    %150 = vmatpush.xpose.msra.mxu0 %v100
    %151 = vmatpush.xpose.msra.mxu0 %v97
    %152 = vmatpush.xpose.msra.mxu0 %v94
    %153 = vmatpush.xpose.msra.mxu0 %v91
    %154 = vmatmul.f32.gmra.mxu0 %v88
    %v155 = vpop.f32.mrf.mxu0
    %v156 = vadd.f32 %v85, %v155
    %157 = vdwg.mxu0
    %158 = vst [vmem:[#allocation2] sm:$0x3] %v156
    // Predicated region
    $region22: #{tpu_custom_call.1} parent=1 // pred_check
      _
    $region23: #{tpu_custom_call.1} parent=1 // pred_check_branch
      %160 = sbr.rel (0) target = $region25
    $region24: #{tpu_custom_call.1} parent=1 // pred_region
      %162 = vsyncadd [#allocation3], 0
      %s164 = sshll.u32 [#allocation2], 4
      %s165 = int_to_ptr.vmem [resolvable:$true] %s164
      %s166 = sshll.u32 %s5, 4
      %s167 = int_to_ptr.hbm [resolvable:$true] %s166
      %169 = dma.vmem_to_hbm [thread:$0]  %s165, 32, %s167, [#allocation3]
    $region25: #{tpu_custom_call.1} parent=1 // pred_fallthru
      _
    // Predicated region
    $region26: #{tpu_custom_call.1} parent=1 // pred_check
      _
    $region27: #{tpu_custom_call.1} parent=1 // pred_check_branch
      %171 = sbr.rel (0) target = $region29
    $region28: #{tpu_custom_call.1} parent=1 // pred_region
      %173 = dma.done [#allocation3], 32
    $region29: #{tpu_custom_call.1} parent=1 // pred_fallthru
      _
    %174 = vsyncpa [#allocation3], 1

</llo_original>
